<compile_context>
chip_gen: v6e
topology: v6e:2x2x1
jax: 0.10.0
libtpu: 0.0.40
codegen_flags: <defaults>
</compile_context>

<pallas_src>
import functools

import jax
import jax.numpy as jnp
from jax.experimental import pallas as pl
from jax.experimental.pallas import tpu as pltpu


def _round_up(x, m):
    return ((x + m - 1) // m) * m


def _pad2d(x, rows, cols):
    return jnp.pad(x, ((0, rows - x.shape[0]), (0, cols - x.shape[1])))


def _pick_tile(n_pad, target):
    """Largest multiple of 128 that divides n_pad and is <= target."""
    t = max(128, (min(target, n_pad) // 128) * 128)
    while n_pad % t:
        t -= 128
    return t


# ---------------------------------------------------------------------------
# Kernel 1: scaled feature transform  XW_s = D^-1/2 (X @ W)
#   (column normalization of A_hat is folded in here, once per layer)
# ---------------------------------------------------------------------------
def _feature_transform_kernel(x_ref, w_ref, dinv_ref, o_ref):
    xw = jnp.dot(x_ref[...], w_ref[...], preferred_element_type=jnp.float32)
    o_ref[...] = (dinv_ref[...] * xw).astype(o_ref.dtype)


def feature_transform(x, w, dinv, *, tile_m):
    """Row-tiled  dinv[:,None] * (X @ W), bf16 MXU feed, bf16 output."""
    n_pad, c_in = x.shape
    c_out = w.shape[1]
    return pl.pallas_call(
        _feature_transform_kernel,
        out_shape=jax.ShapeDtypeStruct((n_pad, c_out), jnp.bfloat16),
        grid=(n_pad // tile_m,),
        in_specs=[
            pl.BlockSpec((tile_m, c_in), lambda i: (i, 0)),
            pl.BlockSpec((c_in, c_out), lambda i: (0, 0)),   # weights resident
            pl.BlockSpec((tile_m, 1), lambda i: (i, 0)),     # D^-1/2 row slice
        ],
        out_specs=pl.BlockSpec((tile_m, c_out), lambda i: (i, 0)),
        compiler_params=pltpu.CompilerParams(dimension_semantics=("parallel",)),
    )(x, w, dinv)


# ---------------------------------------------------------------------------
# Kernel 2: aggregation  Y = D^-1/2 (A + I) XW_s + b
#   A+I streamed as int8 tiles, XW_s resident in VMEM, f32 accumulator.
# ---------------------------------------------------------------------------
def _aggregate_kernel(a_ref, xw_ref, dinv_ref, b_ref, o_ref, acc_ref,
                      *, tile_k, apply_relu):
    k = pl.program_id(1)

    @pl.when(k == 0)
    def _():
        acc_ref[...] = jnp.zeros_like(acc_ref)

    # int8 edge counts -> bf16 on the VPU (free slots under an HBM-bound DMA).
    a_bf16 = a_ref[...].astype(jnp.bfloat16)
    # Slice the K tile out of the VMEM-resident XW (read from HBM exactly once).
    k_off = pl.multiple_of(k * tile_k, 128)
    xw_tile = xw_ref[pl.ds(k_off, tile_k), :]
    acc_ref[...] += jnp.dot(a_bf16, xw_tile, preferred_element_type=jnp.float32)

    @pl.when(k == pl.num_programs(1) - 1)
    def _():
        out = dinv_ref[...] * acc_ref[...] + b_ref[...]   # row D^-1/2, bias (f32, VPU)
        if apply_relu:
            out = jnp.maximum(out, 0.0)
        o_ref[...] = out.astype(o_ref.dtype)


def aggregate(a_i8, xw, dinv, b, *, apply_relu, tile_m, tile_k, out_dtype):
    n_pad = a_i8.shape[0]
    c = xw.shape[1]
    grid = (n_pad // tile_m, n_pad // tile_k)
    kernel = functools.partial(_aggregate_kernel, tile_k=tile_k,
                               apply_relu=apply_relu)

    flops = 2 * n_pad * n_pad * c
    bytes_accessed = (
        a_i8.size * a_i8.dtype.itemsize          # int8 adjacency, streamed once
        + xw.size * xw.dtype.itemsize            # resident XW, read once
        + dinv.size * dinv.dtype.itemsize
        + b.size * b.dtype.itemsize
        + n_pad * c * jnp.dtype(out_dtype).itemsize
    )

    return pl.pallas_call(
        kernel,
        out_shape=jax.ShapeDtypeStruct((n_pad, c), out_dtype),
        grid=grid,
        in_specs=[
            pl.BlockSpec((tile_m, tile_k), lambda i, k: (i, k)),  # (A+I) int8 tile
            pl.BlockSpec((n_pad, c), lambda i, k: (0, 0)),        # XW resident
            pl.BlockSpec((tile_m, 1), lambda i, k: (i, 0)),       # D^-1/2 rows
            pl.BlockSpec((1, c), lambda i, k: (0, 0)),            # bias resident
        ],
        out_specs=pl.BlockSpec((tile_m, c), lambda i, k: (i, 0)),
        scratch_shapes=[pltpu.VMEM((tile_m, c), jnp.float32)],
        compiler_params=pltpu.CompilerParams(
            dimension_semantics=("parallel", "arbitrary"),
            vmem_limit_bytes=48 * 1024 * 1024,   # v5e default is only 16 MiB
        ),
        cost_estimate=pl.CostEstimate(
            flops=flops, transcendentals=0, bytes_accessed=bytes_accessed
        ),
    )(a_i8, xw, dinv, b)


# ---------------------------------------------------------------------------
# Encoder forward: conv1 -> relu -> dropout(eval) -> conv2
# ---------------------------------------------------------------------------
def gcn_encoder_forward(x, edge_index, params, *, training=False,
                        tile_m=512, tile_k=512):
    n, c_in = x.shape
    hidden = params["w1"].shape[1]
    out_c = params["w2"].shape[1]

    # Pad nodes only to 128 (lane-dense), then pick tiles that divide n_pad.
    n_pad = _round_up(n, 128)
    tm = _pick_tile(n_pad, tile_m)
    if n_pad // tm < 2:                      # keep >=2 row blocks for megacore
        tm = _pick_tile(n_pad, max(128, n_pad // 2))
    tk = _pick_tile(n_pad, tile_k)

    h_pad = _round_up(hidden, 128)
    o_pad = _round_up(out_c, 128)

    # --- single-pass construction of padded int8 (A + I) counts and D^-1/2 ---
    src, dst = edge_index[0], edge_index[1]
    diag = jnp.arange(n, dtype=jnp.int32)
    # int8 edge-multiplicity counts (duplicate edges accumulate, as in PyG sum agg).
    a_i8 = jnp.zeros((n_pad, n_pad), jnp.int8)
    a_i8 = a_i8.at[dst, src].add(jnp.ones_like(src, jnp.int8))
    a_i8 = a_i8.at[diag, diag].add(jnp.int8(1))                  # self-loops
    # deg on destination index (+1 self-loop per real node); padded rows -> 0.
    deg = jnp.zeros((n_pad,), jnp.float32).at[dst].add(1.0).at[diag].add(1.0)
    dinv = jnp.where(deg > 0, jax.lax.rsqrt(deg), 0.0).reshape(n_pad, 1)

    # cached=True in the PyTorch module: one normalized adjacency reused twice.
    x_pad = _pad2d(x, n_pad, c_in).astype(jnp.bfloat16)
    w1 = _pad2d(params["w1"], c_in, h_pad).astype(jnp.bfloat16)
    b1 = _pad2d(params["b1"], 1, h_pad).astype(jnp.float32)
    w2 = _pad2d(params["w2"], h_pad, o_pad).astype(jnp.bfloat16)  # zero pad -> exact
    b2 = _pad2d(params["b2"], 1, o_pad).astype(jnp.float32)

    # --- conv1 + ReLU ---
    xw1 = feature_transform(x_pad, w1, dinv, tile_m=tm)           # (n_pad, h_pad) bf16
    h = aggregate(a_i8, xw1, dinv, b1, apply_relu=True,
                  tile_m=tm, tile_k=tk, out_dtype=jnp.bfloat16)

    # eval-mode dropout == identity.
    del training

    # --- conv2 ---
    xw2 = feature_transform(h, w2, dinv, tile_m=tm)               # (n_pad, o_pad) bf16
    out_pad = aggregate(a_i8, xw2, dinv, b2, apply_relu=False,
                        tile_m=tm, tile_k=tk, out_dtype=x.dtype)

    return out_pad[:n, :out_c]


def init_params(key, in_channels, hidden_size, out_channels):
    """Deterministic init matching GCNConv param shapes (glorot W, zero bias)."""
    k1, k2 = jax.random.split(key)

    def glorot(k, fan_in, fan_out):
        limit = jnp.sqrt(6.0 / (fan_in + fan_out))
        return jax.random.uniform(k, (fan_in, fan_out), jnp.float32, -limit, limit)

    return {
        "w1": glorot(k1, in_channels, hidden_size),
        "b1": jnp.zeros((1, hidden_size), jnp.float32),
        "w2": glorot(k2, hidden_size, out_channels),
        "b2": jnp.zeros((1, out_channels), jnp.float32),
    }


def _reference_forward(x, edge_index, params):
    """Pure-JAX f32 reference of the GCNEncoder forward (eval mode)."""
    n = x.shape[0]
    src, dst = edge_index[0], edge_index[1]
    a = jnp.zeros((n, n), jnp.float32).at[dst, src].add(1.0) + jnp.eye(n)
    deg = jnp.sum(a, axis=1)
    dinv = jnp.where(deg > 0, jax.lax.rsqrt(deg), 0.0)
    a_hat = dinv[:, None] * a * dinv[None, :]
    h = jnp.maximum(a_hat @ (x @ params["w1"]) + params["b1"], 0.0)
    return a_hat @ (h @ params["w2"]) + params["b2"]


if __name__ == "__main__":
    N = 16           # number of graph nodes
    IN_C = 8         # in_channels
    HIDDEN = 32      # hidden_size
    OUT_C = 16       # out_channels
    E = 40           # number of edges
    DROPOUT = 0.5    # unused in eval mode

    key = jax.random.PRNGKey(0)
    kx, ke, kp = jax.random.split(key, 3)

    x = jax.random.normal(kx, (N, IN_C), jnp.float32)
    edge_index = jax.random.randint(ke, (2, E), 0, N, dtype=jnp.int32)
    params = init_params(kp, IN_C, HIDDEN, OUT_C)

    out = gcn_encoder_forward(x, edge_index, params)
    out = jax.block_until_ready(out)

    assert out.shape == (N, OUT_C), out.shape
    assert jnp.all(jnp.isfinite(out))

    # bf16 MXU feed -> lenient tolerance vs f32 reference.
    ref = _reference_forward(x, edge_index, params)
    err = jnp.max(jnp.abs(out - ref)) / (jnp.max(jnp.abs(ref)) + 1e-6)
    assert float(err) < 0.1, float(err)

    print("KERNEL_OK")
</pallas_src>

<mosaic_0001>
module attributes {stable_mosaic.version = 11 : i64} {
  func.func @_feature_transform_kernel(%arg0: i32, %arg1: memref<128x8xbf16, #tpu.memory_space<vmem>>, %arg2: memref<8x128xbf16, #tpu.memory_space<vmem>>, %arg3: memref<128x1xf32, #tpu.memory_space<vmem>>, %arg4: memref<128x128xbf16, #tpu.memory_space<vmem>>) attributes {dimension_semantics = [#tpu.dimension_semantics<parallel>], iteration_bounds = array<i64: 1>, scalar_prefetch = 0 : i64, scratch_operands = 0 : i64, tpu.core_type = #tpu.core_type<tc>, window_params = [{transform_indices = @transform_0, window_bounds = array<i64: 128, 8>}, {pipeline_mode = #tpu.pipeline_mode<synchronous>, transform_indices = @transform_1, window_bounds = array<i64: 8, 128>}, {transform_indices = @transform_2, window_bounds = array<i64: 128, 1>}, {transform_indices = @transform_3, window_bounds = array<i64: 128, 128>}]} {
    %c0 = arith.constant 0 : index
    %c0_0 = arith.constant 0 : index
    %0 = vector.load %arg1[%c0, %c0_0] : memref<128x8xbf16, #tpu.memory_space<vmem>>, vector<128x8xbf16>
    %c0_1 = arith.constant 0 : index
    %c0_2 = arith.constant 0 : index
    %1 = vector.load %arg2[%c0_1, %c0_2] : memref<8x128xbf16, #tpu.memory_space<vmem>>, vector<8x128xbf16>
    %cst = arith.constant dense<0.000000e+00> : vector<128x128xf32>
    %2 = tpu.matmul %0, %1, %cst {dimension_numbers = #tpu.dot_dimension_numbers<[1], [0], [0], [1], [0, 0, 1, 1], [], []>} : vector<128x8xbf16>, vector<8x128xbf16>, vector<128x128xf32> -> vector<128x128xf32>
    %c0_3 = arith.constant 0 : index
    %c0_4 = arith.constant 0 : index
    %3 = vector.load %arg3[%c0_3, %c0_4] : memref<128x1xf32, #tpu.memory_space<vmem>>, vector<128x1xf32>
    %4 = vector.broadcast %3 : vector<128x1xf32> to vector<128x128xf32>
    %5 = arith.mulf %4, %2 : vector<128x128xf32>
    %6 = arith.truncf %5 : vector<128x128xf32> to vector<128x128xbf16>
    %c0_5 = arith.constant 0 : index
    %c0_6 = arith.constant 0 : index
    %7 = vector.load %arg4[%c0_5, %c0_6] : memref<128x128xbf16, #tpu.memory_space<vmem>>, vector<128x128xbf16>
    tpu.vector_store %arg4[%c0_5, %c0_6], %6 {strides = array<i32>} : memref<128x128xbf16, #tpu.memory_space<vmem>>, vector<128x128xbf16>,
    return
  }
  func.func @transform_0(%arg0: i32) -> (i32, i32) {
    %c0_i32 = arith.constant 0 : i32
    %c0_i32_0 = arith.constant 0 : i32
    return %arg0, %c0_i32 : i32, i32
  }
  func.func @transform_1(%arg0: i32) -> (i32, i32) {
    %c0_i32 = arith.constant 0 : i32
    %c0_i32_0 = arith.constant 0 : i32
    %c0_i32_1 = arith.constant 0 : i32
    return %c0_i32, %c0_i32_0 : i32, i32
  }
  func.func @transform_2(%arg0: i32) -> (i32, i32) {
    %c0_i32 = arith.constant 0 : i32
    %c0_i32_0 = arith.constant 0 : i32
    return %arg0, %c0_i32 : i32, i32
  }
  func.func @transform_3(%arg0: i32) -> (i32, i32) {
    %c0_i32 = arith.constant 0 : i32
    %c0_i32_0 = arith.constant 0 : i32
    return %arg0, %c0_i32 : i32, i32
  }
}

</mosaic_0001>

<llo_original>
// kernel: tpu_custom_call.1
$region0: #{tpu_custom_call.1}
  #allocation0 [shape = 'u32[]', space=smem, size = 0x4, offset = 0x4, fixed_abs, tag = 'smem constant byte address 0x4 - core index']
  #allocation1 [shape = 'u32[144,128]{1,0:T(1,128)}', space=vmem, size = 0x12000, scoped, tag = 'internal scratch']
  %s0 = inlined_call_operand.vmem [shape: bf16[128,8], index: 0, kind: input, shape index: {}]
  %s1 = inlined_call_operand.vmem [shape: bf16[8,128], index: 1, kind: input, shape index: {}]
  %s2 = inlined_call_operand.vmem [shape: f32[128,1], index: 2, kind: input, shape index: {}]
  %s3 = inlined_call_operand.hbm [shape: bf16[128,128], index: 3, kind: output, shape index: {}]
  %s4 = sld [smem:[#allocation0]]
  $region22: #{tpu_custom_call.1} parent=0
    _
  %s6 = ssub.s32 1, %s4
  %s7 = scalar_select 0, %s6, %s4
  $region1: #{tpu_custom_call.1} parent=0
    #allocation2 [shape = 'u8[32768]{0}', space=vmem, size = 0x8000, scoped, tag = 'output window, operand 0, single buffered']
    #allocation3 [shape = 's32[1]{0}', space=sflag, size = 0x4, scoped, tag = 'scoped memory for tpu_custom_call.1']
    %8 = vsyncpa [#allocation3], 0
    // Predicated region
    $region2: #{tpu_custom_call.1} parent=1 // pred_check
      _
    $region3: #{tpu_custom_call.1} parent=1 // pred_check_branch
      %10 = sbr.rel (0) target = $region5
    $region4: #{tpu_custom_call.1} parent=1 // pred_region
      _
    $region5: #{tpu_custom_call.1} parent=1 // pred_fallthru
      _
    // Predicated region
    $region6: #{tpu_custom_call.1} parent=1 // pred_check
      _
    $region7: #{tpu_custom_call.1} parent=1 // pred_check_branch
      %12 = sbr.rel (0) target = $region9
    $region8: #{tpu_custom_call.1} parent=1 // pred_region
      _
    $region9: #{tpu_custom_call.1} parent=1 // pred_fallthru
      _
    // Predicated region
    $region10: #{tpu_custom_call.1} parent=1 // pred_check
      _
    $region11: #{tpu_custom_call.1} parent=1 // pred_check_branch
      %14 = sbr.rel (0) target = $region13
    $region12: #{tpu_custom_call.1} parent=1 // pred_region
      _
    $region13: #{tpu_custom_call.1} parent=1 // pred_fallthru
      _
    %v16 = vld [vmem:[%s0] sm:$0xf]
    %v17 = vld [vmem:[%s0 + $0x4] sm:$0xf]
    %v18 = vld [vmem:[%s0 + $0x8] sm:$0xf]
    %v19 = vld [vmem:[%s0 + $0xc] sm:$0xf]
    %v20 = vld [vmem:[%s0 + $0x10] sm:$0xf]
    %v21 = vld [vmem:[%s0 + $0x14] sm:$0xf]
    %v22 = vld [vmem:[%s0 + $0x18] sm:$0xf]
    %v23 = vld [vmem:[%s0 + $0x1c] sm:$0xf]
    %v24 = vld [vmem:[%s0 + $0x20] sm:$0xf]
    %v25 = vld [vmem:[%s0 + $0x24] sm:$0xf]
    %v26 = vld [vmem:[%s0 + $0x28] sm:$0xf]
    %v27 = vld [vmem:[%s0 + $0x2c] sm:$0xf]
    %v28 = vld [vmem:[%s0 + $0x30] sm:$0xf]
    %v29 = vld [vmem:[%s0 + $0x34] sm:$0xf]
    %v30 = vld [vmem:[%s0 + $0x38] sm:$0xf]
    %v31 = vld [vmem:[%s0 + $0x3c] sm:$0xf]
    %v32 = vld [vmem:[%s1] sm:$0xf]
    %v49 = vunpack.c.l.b16 %v16
    %v50 = vunpack.c.l.b16 %v17
    %v51 = vunpack.c.l.b16 %v18
    %v52 = vunpack.c.l.b16 %v19
    %v53 = vunpack.c.l.b16 %v20
    %v54 = vunpack.c.l.b16 %v21
    %v55 = vunpack.c.l.b16 %v22
    %v56 = vunpack.c.l.b16 %v23
    %v57 = vunpack.c.l.b16 %v24
    %v58 = vunpack.c.l.b16 %v25
    %v59 = vunpack.c.l.b16 %v26
    %v60 = vunpack.c.l.b16 %v27
    %v61 = vunpack.c.l.b16 %v28
    %v62 = vunpack.c.l.b16 %v29
    %v63 = vunpack.c.l.b16 %v30
    %v64 = vunpack.c.l.b16 %v31
    %v65 = vpack.c.b16 %v50, %v49
    %v66 = vpack.c.b16 %v52, %v51
    %v67 = vpack.c.b16 %v54, %v53
    %v68 = vpack.c.b16 %v56, %v55
    %v69 = vpack.c.b16 %v58, %v57
    %v70 = vpack.c.b16 %v60, %v59
    %v71 = vpack.c.b16 %v62, %v61
    %v72 = vpack.c.b16 %v64, %v63
    %vm73 = vcmask 64512
    %v75 = vsel %vm73, %v65, 0
    %v78 = vsel %vm73, %v66, 0
    %v81 = vsel %vm73, %v67, 0
    %v84 = vsel %vm73, %v68, 0
    %v87 = vsel %vm73, %v69, 0
    %v90 = vsel %vm73, %v70, 0
    %v93 = vsel %vm73, %v71, 0
    %v96 = vsel %vm73, %v72, 0
    %vm98 = vcmask 1043456
    %v100 = vsel %vm98, %v32, 0
    %102 = vmatprep.subr.bf16.mxu0 0
    %103 = vmatpush1.bf16.msra.mxu0 0
    %104 = vmatprep.subr.bf16.mxu0 0
    %105 = vmatpush1.bf16.msra.mxu0 0
    %106 = vmatprep.subr.bf16.mxu0 0
    %107 = vmatpush1.bf16.msra.mxu0 0
    %108 = vmatprep.subr.bf16.mxu0 0
    %109 = vmatpush1.bf16.msra.mxu0 0
    %110 = vmatprep.subr.bf16.mxu0 0
    %111 = vmatpush1.bf16.msra.mxu0 0
    %112 = vmatprep.subr.bf16.mxu0 0
    %113 = vmatpush1.bf16.msra.mxu0 0
    %114 = vmatprep.subr.bf16.mxu0 0
    %115 = vmatpush1.bf16.msra.mxu0 0
    %116 = vmatprep.subr.bf16.mxu0 0
    %117 = vmatpush1.bf16.msra.mxu0 %v100
    %118 = vmatprep.subr.bf16.mxu0 0
    %119 = vmatpush2.bf16.msra.mxu0 0
    %120 = vmatprep.subr.bf16.mxu0 0
    %121 = vmatpush2.bf16.msra.mxu0 0
    %122 = vmatprep.subr.bf16.mxu0 0
    %123 = vmatpush2.bf16.msra.mxu0 0
    %124 = vmatprep.subr.bf16.mxu0 0
    %125 = vmatpush2.bf16.msra.mxu0 0
    %126 = vmatprep.subr.bf16.mxu0 0
    %127 = vmatpush2.bf16.msra.mxu0 0
    %128 = vmatprep.subr.bf16.mxu0 0
    %129 = vmatpush2.bf16.msra.mxu0 0
    %130 = vmatprep.subr.bf16.mxu0 0
    %131 = vmatpush2.bf16.msra.mxu0 0
    %132 = vmatprep.subr.bf16.mxu0 0
    %133 = vmatpush2.bf16.msra.mxu0 0
    %134 = vmatprep.mubr.bf16.mxu0 0
    %135 = vmatmul.mubr.bf16.gmra.mxu0 %v75
    %v136 = vpop.f32.mrf.mxu0
    %v137 = vadd.f32 0.0, %v136
    %v138 = vpop.f32.mrf.mxu0
    %v139 = vpop.f32.mrf.mxu0
    %v140 = vadd.f32 0.0, %v139
    %v141 = vpop.f32.mrf.mxu0
    %142 = vmatprep.mubr.bf16.mxu0 0
    %143 = vmatmul.mubr.bf16.gmra.mxu0 %v78
    %v144 = vpop.f32.mrf.mxu0
    %v145 = vadd.f32 0.0, %v144
    %v146 = vpop.f32.mrf.mxu0
    %v147 = vpop.f32.mrf.mxu0
    %v148 = vadd.f32 0.0, %v147
    %v149 = vpop.f32.mrf.mxu0
    %150 = vmatprep.mubr.bf16.mxu0 0
    %151 = vmatmul.mubr.bf16.gmra.mxu0 %v81
    %v152 = vpop.f32.mrf.mxu0
    %v153 = vadd.f32 0.0, %v152
    %v154 = vpop.f32.mrf.mxu0
    %v155 = vpop.f32.mrf.mxu0
    %v156 = vadd.f32 0.0, %v155
    %v157 = vpop.f32.mrf.mxu0
    %158 = vmatprep.mubr.bf16.mxu0 0
    %159 = vmatmul.mubr.bf16.gmra.mxu0 %v84
    %v160 = vpop.f32.mrf.mxu0
    %v161 = vadd.f32 0.0, %v160
    %v162 = vpop.f32.mrf.mxu0
    %v163 = vpop.f32.mrf.mxu0
    %v164 = vadd.f32 0.0, %v163
    %v165 = vpop.f32.mrf.mxu0
    %166 = vmatprep.mubr.bf16.mxu0 0
    %167 = vmatmul.mubr.bf16.gmra.mxu0 %v87
    %v168 = vpop.f32.mrf.mxu0
    %v169 = vadd.f32 0.0, %v168
    %v170 = vpop.f32.mrf.mxu0
    %v171 = vpop.f32.mrf.mxu0
    %v172 = vadd.f32 0.0, %v171
    %v173 = vpop.f32.mrf.mxu0
    %174 = vmatprep.mubr.bf16.mxu0 0
    %175 = vmatmul.mubr.bf16.gmra.mxu0 %v90
    %v176 = vpop.f32.mrf.mxu0
    %v177 = vadd.f32 0.0, %v176
    %v178 = vpop.f32.mrf.mxu0
    %v179 = vpop.f32.mrf.mxu0
    %v180 = vadd.f32 0.0, %v179
    %v181 = vpop.f32.mrf.mxu0
    %182 = vmatprep.mubr.bf16.mxu0 0
    %183 = vmatmul.mubr.bf16.gmra.mxu0 %v93
    %v184 = vpop.f32.mrf.mxu0
    %v185 = vadd.f32 0.0, %v184
    %v186 = vpop.f32.mrf.mxu0
    %v187 = vpop.f32.mrf.mxu0
    %v188 = vadd.f32 0.0, %v187
    %v189 = vpop.f32.mrf.mxu0
    %190 = vmatprep.mubr.bf16.mxu0 0
    %191 = vmatmul.mubr.bf16.gmra.mxu0 %v96
    %v192 = vpop.f32.mrf.mxu0
    %v193 = vadd.f32 0.0, %v192
    %v194 = vpop.f32.mrf.mxu0
    %v195 = vpop.f32.mrf.mxu0
    %v196 = vadd.f32 0.0, %v195
    %v197 = vpop.f32.mrf.mxu0
    %198 = vdwg.mxu0
    %v199 = vld [vmem:[%s2] sm:$0xff]
    %v200 = vld [vmem:[%s2 + $0x8] sm:$0xff]
    %v201 = vld [vmem:[%s2 + $0x10] sm:$0xff]
    %v202 = vld [vmem:[%s2 + $0x18] sm:$0xff]
    %v203 = vld [vmem:[%s2 + $0x20] sm:$0xff]
    %v204 = vld [vmem:[%s2 + $0x28] sm:$0xff]
    %v205 = vld [vmem:[%s2 + $0x30] sm:$0xff]
    %v206 = vld [vmem:[%s2 + $0x38] sm:$0xff]
    %v207 = vld [vmem:[%s2 + $0x40] sm:$0xff]
    %v208 = vld [vmem:[%s2 + $0x48] sm:$0xff]
    %v209 = vld [vmem:[%s2 + $0x50] sm:$0xff]
    %v210 = vld [vmem:[%s2 + $0x58] sm:$0xff]
    %v211 = vld [vmem:[%s2 + $0x60] sm:$0xff]
    %v212 = vld [vmem:[%s2 + $0x68] sm:$0xff]
    %v213 = vld [vmem:[%s2 + $0x70] sm:$0xff]
    %v214 = vld [vmem:[%s2 + $0x78] sm:$0xff]
    %216 = vset.pattern.permute.xlu0 0
    %217 = vperm.xlu0 %216, %v199
    %v218 = vpop.permute.xlu0 %217
    %221 = vset.pattern.permute.xlu0 0
    %222 = vperm.xlu0 %221, %v200
    %v223 = vpop.permute.xlu0 %222
    %226 = vset.pattern.permute.xlu0 0
    %227 = vperm.xlu0 %226, %v201
    %v228 = vpop.permute.xlu0 %227
    %231 = vset.pattern.permute.xlu0 0
    %232 = vperm.xlu0 %231, %v202
    %v233 = vpop.permute.xlu0 %232
    %236 = vset.pattern.permute.xlu0 0
    %237 = vperm.xlu0 %236, %v203
    %v238 = vpop.permute.xlu0 %237
    %241 = vset.pattern.permute.xlu0 0
    %242 = vperm.xlu0 %241, %v204
    %v243 = vpop.permute.xlu0 %242
    %246 = vset.pattern.permute.xlu0 0
    %247 = vperm.xlu0 %246, %v205
    %v248 = vpop.permute.xlu0 %247
    %251 = vset.pattern.permute.xlu0 0
    %252 = vperm.xlu0 %251, %v206
    %v253 = vpop.permute.xlu0 %252
    %256 = vset.pattern.permute.xlu0 0
    %257 = vperm.xlu0 %256, %v207
    %v258 = vpop.permute.xlu0 %257
    %261 = vset.pattern.permute.xlu0 0
    %262 = vperm.xlu0 %261, %v208
    %v263 = vpop.permute.xlu0 %262
    %266 = vset.pattern.permute.xlu0 0
    %267 = vperm.xlu0 %266, %v209
    %v268 = vpop.permute.xlu0 %267
    %271 = vset.pattern.permute.xlu0 0
    %272 = vperm.xlu0 %271, %v210
    %v273 = vpop.permute.xlu0 %272
    %276 = vset.pattern.permute.xlu0 0
    %277 = vperm.xlu0 %276, %v211
    %v278 = vpop.permute.xlu0 %277
    %281 = vset.pattern.permute.xlu0 0
    %282 = vperm.xlu0 %281, %v212
    %v283 = vpop.permute.xlu0 %282
    %286 = vset.pattern.permute.xlu0 0
    %287 = vperm.xlu0 %286, %v213
    %v288 = vpop.permute.xlu0 %287
    %291 = vset.pattern.permute.xlu0 0
    %292 = vperm.xlu0 %291, %v214
    %v293 = vpop.permute.xlu0 %292
    %v295 = vmul.f32 %v218, %v137
    %v296 = vmul.f32 %v223, %v140
    %v297 = vmul.f32 %v228, %v145
    %v298 = vmul.f32 %v233, %v148
    %v299 = vmul.f32 %v238, %v153
    %v300 = vmul.f32 %v243, %v156
    %v301 = vmul.f32 %v248, %v161
    %v302 = vmul.f32 %v253, %v164
    %v303 = vmul.f32 %v258, %v169
    %v304 = vmul.f32 %v263, %v172
    %v305 = vmul.f32 %v268, %v177
    %v306 = vmul.f32 %v273, %v180
    %v307 = vmul.f32 %v278, %v185
    %v308 = vmul.f32 %v283, %v188
    %v309 = vmul.f32 %v288, %v193
    %v310 = vmul.f32 %v293, %v196
    %v311 = vpack.c.bf16 %v296, %v295
    %v312 = vpack.c.bf16 %v298, %v297
    %v313 = vpack.c.bf16 %v300, %v299
    %v314 = vpack.c.bf16 %v302, %v301
    %v315 = vpack.c.bf16 %v304, %v303
    %v316 = vpack.c.bf16 %v306, %v305
    %v317 = vpack.c.bf16 %v308, %v307
    %v318 = vpack.c.bf16 %v310, %v309
    %v327 = vunpack.c.l.b16 %v311
    %v328 = vunpack.c.h.b16 %v311
    %v329 = vunpack.c.l.b16 %v312
    %v330 = vunpack.c.h.b16 %v312
    %v331 = vunpack.c.l.b16 %v313
    %v332 = vunpack.c.h.b16 %v313
    %v333 = vunpack.c.l.b16 %v314
    %v334 = vunpack.c.h.b16 %v314
    %v335 = vunpack.c.l.b16 %v315
    %v336 = vunpack.c.h.b16 %v315
    %v337 = vunpack.c.l.b16 %v316
    %v338 = vunpack.c.h.b16 %v316
    %v339 = vunpack.c.l.b16 %v317
    %v340 = vunpack.c.h.b16 %v317
    %v341 = vunpack.c.l.b16 %v318
    %v342 = vunpack.c.h.b16 %v318
    %v343 = vpack.c.b16 %v327, %v327
    %v344 = vpack.c.b16 %v328, %v328
    %v345 = vpack.c.b16 %v329, %v329
    %v346 = vpack.c.b16 %v330, %v330
    %v347 = vpack.c.b16 %v331, %v331
    %v348 = vpack.c.b16 %v332, %v332
    %v349 = vpack.c.b16 %v333, %v333
    %v350 = vpack.c.b16 %v334, %v334
    %v351 = vpack.c.b16 %v335, %v335
    %v352 = vpack.c.b16 %v336, %v336
    %v353 = vpack.c.b16 %v337, %v337
    %v354 = vpack.c.b16 %v338, %v338
    %v355 = vpack.c.b16 %v339, %v339
    %v356 = vpack.c.b16 %v340, %v340
    %v357 = vpack.c.b16 %v341, %v341
    %v358 = vpack.c.b16 %v342, %v342
    %375 = vst [vmem:[#allocation2] sm:$0xf] %v343
    %376 = vst [vmem:[#allocation2 + $0x4] sm:$0xf] %v344
    %377 = vst [vmem:[#allocation2 + $0x8] sm:$0xf] %v345
    %378 = vst [vmem:[#allocation2 + $0xc] sm:$0xf] %v346
    %379 = vst [vmem:[#allocation2 + $0x10] sm:$0xf] %v347
    %380 = vst [vmem:[#allocation2 + $0x14] sm:$0xf] %v348
    %381 = vst [vmem:[#allocation2 + $0x18] sm:$0xf] %v349
    %382 = vst [vmem:[#allocation2 + $0x1c] sm:$0xf] %v350
    %383 = vst [vmem:[#allocation2 + $0x20] sm:$0xf] %v351
    %384 = vst [vmem:[#allocation2 + $0x24] sm:$0xf] %v352
    %385 = vst [vmem:[#allocation2 + $0x28] sm:$0xf] %v353
    %386 = vst [vmem:[#allocation2 + $0x2c] sm:$0xf] %v354
    %387 = vst [vmem:[#allocation2 + $0x30] sm:$0xf] %v355
    %388 = vst [vmem:[#allocation2 + $0x34] sm:$0xf] %v356
    %389 = vst [vmem:[#allocation2 + $0x38] sm:$0xf] %v357
    %390 = vst [vmem:[#allocation2 + $0x3c] sm:$0xf] %v358
    // Predicated region
    $region14: #{tpu_custom_call.1} parent=1 // pred_check
      _
    $region15: #{tpu_custom_call.1} parent=1 // pred_check_branch
      %392 = sbr.rel (0) target = $region17
    $region16: #{tpu_custom_call.1} parent=1 // pred_region
      %s394 = ssub.s32 1024, 1024
      %395 = vsyncadd [#allocation3], %s394
      %s396 = sshll.u32 [#allocation2], 4
      %s397 = int_to_ptr.vmem [resolvable:$true] %s396
      %402 = dma.vmem_to_hbm [thread:$0]  %s397, 1024, %s3, [#allocation3], 64, 64, 4
    $region17: #{tpu_custom_call.1} parent=1 // pred_fallthru
      _
    // Predicated region
    $region18: #{tpu_custom_call.1} parent=1 // pred_check
      _
    $region19: #{tpu_custom_call.1} parent=1 // pred_check_branch
      %404 = sbr.rel (0) target = $region21
    $region20: #{tpu_custom_call.1} parent=1 // pred_region
      %405 = dma.done [#allocation3], 1024
    $region21: #{tpu_custom_call.1} parent=1 // pred_fallthru
      _
    %406 = vsyncpa [#allocation3], 1

</llo_original>
